<compile_context>
chip_gen: v7x
topology: tpu7x:2x2x1
jax: 0.10.0
libtpu: 0.0.40
codegen_flags: <defaults>
</compile_context>

<pallas_src>
import functools

import jax
import jax.numpy as jnp
import numpy as np
from jax.experimental import pallas as pl
from jax.experimental.pallas import tpu as pltpu

EPS = 1e-5


# ---------------------------------------------------------------------------
# Pallas kernels (transposed layout: rows = channels/taps, lanes = M)
# ---------------------------------------------------------------------------
def _bn_relu_conv_kernel(p_ref, s_ref, sh_ref, w_ref, b_ref, o_ref):
    """o^T = W^T @ relu(scale * patches^T + shift) + b   (one GEMM per tile).

    p_ref : (9*Cin, TILE_M) f32   im2col patches, tap-major rows
    s_ref, sh_ref : (9*Cin, 1) f32 precomputed BN scale/shift (tap-replicated)
    w_ref : (Cout, 9*Cin) bf16    folded conv weights
    b_ref : (Cout, 1) f32         conv bias
    o_ref : (Cout, TILE_M) f32    lane-dense output
    """
    a = jnp.maximum(p_ref[...] * s_ref[...] + sh_ref[...], 0.0)      # f32
    acc = jnp.dot(w_ref[...], a.astype(jnp.bfloat16),
                  preferred_element_type=jnp.float32)                # MXU, f32 acc
    o_ref[...] = acc + b_ref[...]


def _bn_relu_conv_plus_res_kernel(p_ref, s_ref, sh_ref, w_ref,
                                  xr_ref, sr_ref, shr_ref, wr_ref,
                                  b_ref, o_ref):
    """conv2 tile fused with the residual path:
       o^T = W2^T @ relu(bn2(patches2^T)) + Wres^T @ bn_res(xr^T) + (b2 + b_res)
    """
    a = jnp.maximum(p_ref[...] * s_ref[...] + sh_ref[...], 0.0)      # (9*Cout, Tm)
    r = xr_ref[...] * sr_ref[...] + shr_ref[...]                     # (Cin, Tm)
    acc = jnp.dot(w_ref[...], a.astype(jnp.bfloat16),
                  preferred_element_type=jnp.float32)
    acc = acc + jnp.dot(wr_ref[...], r.astype(jnp.bfloat16),
                        preferred_element_type=jnp.float32)
    o_ref[...] = acc + b_ref[...]


# ---------------------------------------------------------------------------
# pallas_call wrappers
# ---------------------------------------------------------------------------
_COMPILER_PARAMS = pltpu.CompilerParams(
    dimension_semantics=("parallel",),        # megacore split of the M tiles (v7x)
    vmem_limit_bytes=32 * 1024 * 1024,        # explicit scoped-VMEM budget
)


def _pick_tile_m(m):
    # Per-tile VMEM footprint here is tiny (<1 MiB at 2048 rows for these channel
    # counts); on v7x (64 MiB VMEM) re-derive the cap if channels grow.
    for t in (2048, 1024, 512, 256, 128):
        if m % t == 0:
            return t
    return m   # tiny / ragged fallback: single full-extent block


def _const_spec(shape):
    return pl.BlockSpec(shape, lambda i: (0, 0))


def _call_conv1(patches_t, scale, shift, w_t, bias):
    kc, m = patches_t.shape
    cout = w_t.shape[0]
    tm = _pick_tile_m(m)
    return pl.pallas_call(
        _bn_relu_conv_kernel,
        out_shape=jax.ShapeDtypeStruct((cout, m), jnp.float32),
        grid=(m // tm,),
        in_specs=[pl.BlockSpec((kc, tm), lambda i: (0, i)),
                  _const_spec((kc, 1)),
                  _const_spec((kc, 1)),
                  _const_spec((cout, kc)),
                  _const_spec((cout, 1))],
        out_specs=pl.BlockSpec((cout, tm), lambda i: (0, i)),
        compiler_params=_COMPILER_PARAMS,
    )(patches_t, scale, shift, w_t, bias)


def _call_conv2_res(patches_t, scale, shift, w_t, xr_t, sres, shres, wres_t, bias):
    kc, m = patches_t.shape
    cout = w_t.shape[0]
    cin = xr_t.shape[0]
    tm = _pick_tile_m(m)
    return pl.pallas_call(
        _bn_relu_conv_plus_res_kernel,
        out_shape=jax.ShapeDtypeStruct((cout, m), jnp.float32),
        grid=(m // tm,),
        in_specs=[pl.BlockSpec((kc, tm), lambda i: (0, i)),
                  _const_spec((kc, 1)),
                  _const_spec((kc, 1)),
                  _const_spec((cout, kc)),
                  pl.BlockSpec((cin, tm), lambda i: (0, i)),
                  _const_spec((cin, 1)),
                  _const_spec((cin, 1)),
                  _const_spec((cout, cin)),
                  _const_spec((cout, 1))],
        out_specs=pl.BlockSpec((cout, tm), lambda i: (0, i)),
        compiler_params=_COMPILER_PARAMS,
    )(patches_t, scale, shift, w_t, xr_t, sres, shres, wres_t, bias)


# ---------------------------------------------------------------------------
# Glue (data movement / tiny reductions / parameter reshaping)
# ---------------------------------------------------------------------------
def _bn_scale_shift(x_mc, gamma, beta):
    """Training-mode BN over (M, C): per-channel (scale, shift), each (C, 1) f32."""
    mu = jnp.mean(x_mc, axis=0)
    var = jnp.mean(jnp.square(x_mc - mu), axis=0)      # biased, like torch BN train
    scale = gamma * jax.lax.rsqrt(var + EPS)
    shift = beta - mu * scale
    return scale[:, None], shift[:, None]


def _im2col_t(x_nhwc, ks, stride):
    """Reflect-pad + gather -> (ks*ks*C, M) patches^T with tap-major rows."""
    # TODO(synk): generate the 9 taps in-kernel from a haloed VMEM tile
    # (overlapping/Element BlockSpec or pltpu.roll) to avoid materializing the
    # tap-inflated patch array in HBM.
    pad = ks // 2
    n, h, w, c = x_nhwc.shape
    xp = jnp.pad(x_nhwc, ((0, 0), (pad, pad), (pad, pad), (0, 0)), mode="reflect")
    ho = (h + 2 * pad - ks) // stride + 1
    wo = (w + 2 * pad - ks) // stride + 1
    taps = []
    for dy in range(ks):
        for dx in range(ks):
            sl = xp[:, dy:dy + stride * ho:stride, dx:dx + stride * wo:stride, :]
            taps.append(sl.reshape(n * ho * wo, c))
    patches = jnp.concatenate(taps, axis=1)            # (M, ks*ks*C), cols = t*C + ci
    return patches.T, (n, ho, wo)


def _weight_t(w_oihw):
    """(Cout, Cin, kh, kw) torch conv weight -> (Cout, kh*kw*Cin) bf16, tap-major."""
    cout, cin, kh, kw = w_oihw.shape
    return (jnp.transpose(w_oihw, (0, 2, 3, 1))
            .reshape(cout, kh * kw * cin).astype(jnp.bfloat16))


@functools.partial(jax.jit, static_argnames=("ks",))
def resblock_down(x_nchw, params, ks=3):
    n, cin, h, w = x_nchw.shape
    cout = params["w1"].shape[0]
    kk = ks * ks
    x = jnp.transpose(x_nchw, (0, 2, 3, 1))                        # NCHW -> NHWC (f32)

    # --- main path, conv1: bn1 -> relu -> 3x3 stride-2 reflect conv (fused) ---
    s1, sh1 = _bn_scale_shift(x.reshape(-1, cin), params["g1"], params["bt1"])
    p1_t, (_, ho, wo) = _im2col_t(x, ks, stride=2)
    y1_t = _call_conv1(p1_t,
                       jnp.tile(s1, (kk, 1)), jnp.tile(sh1, (kk, 1)),
                       _weight_t(params["w1"]), params["b1"][:, None])   # (Cout, M)

    # --- main path conv2 + residual path, fused in one kernel ---
    m = n * ho * wo
    y1_nhwc = y1_t.T.reshape(n, ho, wo, cout)
    s2, sh2 = _bn_scale_shift(y1_t.T, params["g2"], params["bt2"])
    p2_t, _ = _im2col_t(y1_nhwc, ks, stride=1)

    # residual: 2x2 avgpool as reshape+mean (no phase stacking), bn_res in-kernel
    xr = jnp.mean(x.reshape(n, ho, 2, wo, 2, cin), axis=(2, 4))     # (n, ho, wo, cin)
    sr, shr = _bn_scale_shift(xr.reshape(m, cin), params["g_res"], params["bt_res"])
    xr_t = xr.reshape(m, cin).T                                     # (Cin, M)

    w_res_t = params["w_res"][:, :, 0, 0].astype(jnp.bfloat16)      # (Cout, Cin)
    bias = (params["b2"] + params["b_res"])[:, None]                # (Cout, 1)

    out_t = _call_conv2_res(p2_t,
                            jnp.tile(s2, (kk, 1)), jnp.tile(sh2, (kk, 1)),
                            _weight_t(params["w2"]),
                            xr_t, sr, shr, w_res_t, bias)           # (Cout, M)

    out = out_t.T.reshape(n, ho, wo, cout)
    return jnp.transpose(out, (0, 3, 1, 2))                         # NHWC -> NCHW


# ---------------------------------------------------------------------------
# Pure-JAX f32 reference (same math, NCHW) for the correctness check
# ---------------------------------------------------------------------------
def reference(x, params, ks=3):
    def bn(v, g, b):
        mu = jnp.mean(v, axis=(0, 2, 3), keepdims=True)
        var = jnp.mean((v - mu) ** 2, axis=(0, 2, 3), keepdims=True)
        return ((v - mu) * jax.lax.rsqrt(var + EPS) * g[None, :, None, None]
                + b[None, :, None, None])

    def conv(v, w, b, stride, reflect_pad):
        if reflect_pad:
            p = ks // 2
            v = jnp.pad(v, ((0, 0), (0, 0), (p, p), (p, p)), mode="reflect")
        o = jax.lax.conv_general_dilated(
            v, w, (stride, stride), "VALID",
            dimension_numbers=("NCHW", "OIHW", "NCHW"),
            precision=jax.lax.Precision.HIGHEST)
        return o + b[None, :, None, None]

    n, c, h, w = x.shape
    xr = jnp.mean(x.reshape(n, c, h // 2, 2, w // 2, 2), axis=(3, 5))
    xr = conv(bn(xr, params["g_res"], params["bt_res"]),
              params["w_res"], params["b_res"], 1, False)
    h1 = conv(jnp.maximum(bn(x, params["g1"], params["bt1"]), 0.0),
              params["w1"], params["b1"], 2, True)
    h2 = conv(jnp.maximum(bn(h1, params["g2"], params["bt2"]), 0.0),
              params["w2"], params["b2"], 1, True)
    return xr + h2


# ---------------------------------------------------------------------------
if __name__ == "__main__":
    N, CIN, COUT, H, W = 2, 4, 8, 16, 16
    keys = jax.random.split(jax.random.PRNGKey(0), 13)
    params = {
        "w_res":  0.3 * jax.random.normal(keys[0], (COUT, CIN, 1, 1), jnp.float32),
        "b_res":  0.1 * jax.random.normal(keys[1], (COUT,), jnp.float32),
        "w1":     0.2 * jax.random.normal(keys[2], (COUT, CIN, 3, 3), jnp.float32),
        "b1":     0.1 * jax.random.normal(keys[3], (COUT,), jnp.float32),
        "w2":     0.2 * jax.random.normal(keys[4], (COUT, COUT, 3, 3), jnp.float32),
        "b2":     0.1 * jax.random.normal(keys[5], (COUT,), jnp.float32),
        "g_res":  1.0 + 0.1 * jax.random.normal(keys[6], (CIN,), jnp.float32),
        "bt_res": 0.1 * jax.random.normal(keys[7], (CIN,), jnp.float32),
        "g1":     1.0 + 0.1 * jax.random.normal(keys[8], (CIN,), jnp.float32),
        "bt1":    0.1 * jax.random.normal(keys[9], (CIN,), jnp.float32),
        "g2":     1.0 + 0.1 * jax.random.normal(keys[10], (COUT,), jnp.float32),
        "bt2":    0.1 * jax.random.normal(keys[11], (COUT,), jnp.float32),
    }
    x = jax.random.normal(keys[12], (N, CIN, H, W), jnp.float32)

    out = resblock_down(x, params)
    jax.block_until_ready(out)

    assert out.shape == (N, COUT, H // 2, W // 2), out.shape
    ref = reference(x, params)
    # Tolerance loosened vs. the f32/HIGHEST reference because the MXU matmul
    # operands are bf16 (accumulation in f32), compounded through two convs.
    np.testing.assert_allclose(np.asarray(out), np.asarray(ref),
                               rtol=5e-2, atol=5e-2)
    print("KERNEL_OK")
</pallas_src>

<mosaic_0001>
module attributes {stable_mosaic.version = 11 : i64} {
  func.func @_bn_relu_conv_kernel(%arg0: i32, %arg1: memref<36x128xf32, #tpu.memory_space<vmem>>, %arg2: memref<36x1xf32, #tpu.memory_space<vmem>>, %arg3: memref<36x1xf32, #tpu.memory_space<vmem>>, %arg4: memref<8x36xbf16, #tpu.memory_space<vmem>>, %arg5: memref<8x1xf32, #tpu.memory_space<vmem>>, %arg6: memref<8x128xf32, #tpu.memory_space<vmem>>) attributes {dimension_semantics = [#tpu.dimension_semantics<parallel>], iteration_bounds = array<i64: 1>, scalar_prefetch = 0 : i64, scratch_operands = 0 : i64, tpu.core_type = #tpu.core_type<tc>, window_params = [{transform_indices = @transform_0, window_bounds = array<i64: 36, 128>}, {pipeline_mode = #tpu.pipeline_mode<synchronous>, transform_indices = @transform_1, window_bounds = array<i64: 36, 1>}, {pipeline_mode = #tpu.pipeline_mode<synchronous>, transform_indices = @transform_2, window_bounds = array<i64: 36, 1>}, {pipeline_mode = #tpu.pipeline_mode<synchronous>, transform_indices = @transform_3, window_bounds = array<i64: 8, 36>}, {pipeline_mode = #tpu.pipeline_mode<synchronous>, transform_indices = @transform_4, window_bounds = array<i64: 8, 1>}, {transform_indices = @transform_5, window_bounds = array<i64: 8, 128>}]} {
    %c0 = arith.constant 0 : index
    %c0_0 = arith.constant 0 : index
    %0 = vector.load %arg1[%c0, %c0_0] : memref<36x128xf32, #tpu.memory_space<vmem>>, vector<36x128xf32>
    %c0_1 = arith.constant 0 : index
    %c0_2 = arith.constant 0 : index
    %1 = vector.load %arg2[%c0_1, %c0_2] : memref<36x1xf32, #tpu.memory_space<vmem>>, vector<36x1xf32>
    %2 = vector.broadcast %1 : vector<36x1xf32> to vector<36x128xf32>
    %3 = arith.mulf %0, %2 : vector<36x128xf32>
    %c0_3 = arith.constant 0 : index
    %c0_4 = arith.constant 0 : index
    %4 = vector.load %arg3[%c0_3, %c0_4] : memref<36x1xf32, #tpu.memory_space<vmem>>, vector<36x1xf32>
    %5 = vector.broadcast %4 : vector<36x1xf32> to vector<36x128xf32>
    %6 = arith.addf %3, %5 : vector<36x128xf32>
    %cst = arith.constant 0.000000e+00 : f32
    %7 = vector.broadcast %cst : f32 to vector<36x128xf32>
    %8 = arith.maximumf %6, %7 : vector<36x128xf32>
    %c0_5 = arith.constant 0 : index
    %c0_6 = arith.constant 0 : index
    %9 = vector.load %arg4[%c0_5, %c0_6] : memref<8x36xbf16, #tpu.memory_space<vmem>>, vector<8x36xbf16>
    %10 = arith.truncf %8 : vector<36x128xf32> to vector<36x128xbf16>
    %cst_7 = arith.constant dense<0.000000e+00> : vector<8x128xf32>
    %11 = tpu.matmul %9, %10, %cst_7 {dimension_numbers = #tpu.dot_dimension_numbers<[1], [0], [0], [1], [0, 0, 1, 1], [], []>} : vector<8x36xbf16>, vector<36x128xbf16>, vector<8x128xf32> -> vector<8x128xf32>
    %c0_8 = arith.constant 0 : index
    %c0_9 = arith.constant 0 : index
    %12 = vector.load %arg5[%c0_8, %c0_9] : memref<8x1xf32, #tpu.memory_space<vmem>>, vector<8x1xf32>
    %13 = vector.broadcast %12 : vector<8x1xf32> to vector<8x128xf32>
    %14 = arith.addf %11, %13 : vector<8x128xf32>
    %c0_10 = arith.constant 0 : index
    %c0_11 = arith.constant 0 : index
    %15 = vector.load %arg6[%c0_10, %c0_11] : memref<8x128xf32, #tpu.memory_space<vmem>>, vector<8x128xf32>
    tpu.vector_store %arg6[%c0_10, %c0_11], %14 {strides = array<i32>} : memref<8x128xf32, #tpu.memory_space<vmem>>, vector<8x128xf32>,
    return
  }
  func.func @transform_0(%arg0: i32) -> (i32, i32) {
    %c0_i32 = arith.constant 0 : i32
    %c0_i32_0 = arith.constant 0 : i32
    return %c0_i32, %arg0 : i32, i32
  }
  func.func @transform_1(%arg0: i32) -> (i32, i32) {
    %c0_i32 = arith.constant 0 : i32
    %c0_i32_0 = arith.constant 0 : i32
    %c0_i32_1 = arith.constant 0 : i32
    return %c0_i32, %c0_i32_0 : i32, i32
  }
  func.func @transform_2(%arg0: i32) -> (i32, i32) {
    %c0_i32 = arith.constant 0 : i32
    %c0_i32_0 = arith.constant 0 : i32
    %c0_i32_1 = arith.constant 0 : i32
    return %c0_i32, %c0_i32_0 : i32, i32
  }
  func.func @transform_3(%arg0: i32) -> (i32, i32) {
    %c0_i32 = arith.constant 0 : i32
    %c0_i32_0 = arith.constant 0 : i32
    %c0_i32_1 = arith.constant 0 : i32
    return %c0_i32, %c0_i32_0 : i32, i32
  }
  func.func @transform_4(%arg0: i32) -> (i32, i32) {
    %c0_i32 = arith.constant 0 : i32
    %c0_i32_0 = arith.constant 0 : i32
    %c0_i32_1 = arith.constant 0 : i32
    return %c0_i32, %c0_i32_0 : i32, i32
  }
  func.func @transform_5(%arg0: i32) -> (i32, i32) {
    %c0_i32 = arith.constant 0 : i32
    %c0_i32_0 = arith.constant 0 : i32
    return %c0_i32, %arg0 : i32, i32
  }
}

module attributes {stable_mosaic.version = 11 : i64} {
  func.func @_bn_relu_conv_plus_res_kernel(%arg0: i32, %arg1: memref<72x128xf32, #tpu.memory_space<vmem>>, %arg2: memref<72x1xf32, #tpu.memory_space<vmem>>, %arg3: memref<72x1xf32, #tpu.memory_space<vmem>>, %arg4: memref<8x72xbf16, #tpu.memory_space<vmem>>, %arg5: memref<4x128xf32, #tpu.memory_space<vmem>>, %arg6: memref<4x1xf32, #tpu.memory_space<vmem>>, %arg7: memref<4x1xf32, #tpu.memory_space<vmem>>, %arg8: memref<8x4xbf16, #tpu.memory_space<vmem>>, %arg9: memref<8x1xf32, #tpu.memory_space<vmem>>, %arg10: memref<8x128xf32, #tpu.memory_space<vmem>>) attributes {dimension_semantics = [#tpu.dimension_semantics<parallel>], iteration_bounds = array<i64: 1>, scalar_prefetch = 0 : i64, scratch_operands = 0 : i64, tpu.core_type = #tpu.core_type<tc>, window_params = [{transform_indices = @transform_0, window_bounds = array<i64: 72, 128>}, {pipeline_mode = #tpu.pipeline_mode<synchronous>, transform_indices = @transform_1, window_bounds = array<i64: 72, 1>}, {pipeline_mode = #tpu.pipeline_mode<synchronous>, transform_indices = @transform_2, window_bounds = array<i64: 72, 1>}, {pipeline_mode = #tpu.pipeline_mode<synchronous>, transform_indices = @transform_3, window_bounds = array<i64: 8, 72>}, {transform_indices = @transform_4, window_bounds = array<i64: 4, 128>}, {pipeline_mode = #tpu.pipeline_mode<synchronous>, transform_indices = @transform_5, window_bounds = array<i64: 4, 1>}, {pipeline_mode = #tpu.pipeline_mode<synchronous>, transform_indices = @transform_6, window_bounds = array<i64: 4, 1>}, {pipeline_mode = #tpu.pipeline_mode<synchronous>, transform_indices = @transform_7, window_bounds = array<i64: 8, 4>}, {pipeline_mode = #tpu.pipeline_mode<synchronous>, transform_indices = @transform_8, window_bounds = array<i64: 8, 1>}, {transform_indices = @transform_9, window_bounds = array<i64: 8, 128>}]} {
    %c0 = arith.constant 0 : index
    %c0_0 = arith.constant 0 : index
    %0 = vector.load %arg1[%c0, %c0_0] : memref<72x128xf32, #tpu.memory_space<vmem>>, vector<72x128xf32>
    %c0_1 = arith.constant 0 : index
    %c0_2 = arith.constant 0 : index
    %1 = vector.load %arg2[%c0_1, %c0_2] : memref<72x1xf32, #tpu.memory_space<vmem>>, vector<72x1xf32>
    %2 = vector.broadcast %1 : vector<72x1xf32> to vector<72x128xf32>
    %3 = arith.mulf %0, %2 : vector<72x128xf32>
    %c0_3 = arith.constant 0 : index
    %c0_4 = arith.constant 0 : index
    %4 = vector.load %arg3[%c0_3, %c0_4] : memref<72x1xf32, #tpu.memory_space<vmem>>, vector<72x1xf32>
    %5 = vector.broadcast %4 : vector<72x1xf32> to vector<72x128xf32>
    %6 = arith.addf %3, %5 : vector<72x128xf32>
    %cst = arith.constant 0.000000e+00 : f32
    %7 = vector.broadcast %cst : f32 to vector<72x128xf32>
    %8 = arith.maximumf %6, %7 : vector<72x128xf32>
    %c0_5 = arith.constant 0 : index
    %c0_6 = arith.constant 0 : index
    %9 = vector.load %arg5[%c0_5, %c0_6] : memref<4x128xf32, #tpu.memory_space<vmem>>, vector<4x128xf32>
    %c0_7 = arith.constant 0 : index
    %c0_8 = arith.constant 0 : index
    %10 = vector.load %arg6[%c0_7, %c0_8] : memref<4x1xf32, #tpu.memory_space<vmem>>, vector<4x1xf32>
    %11 = vector.broadcast %10 : vector<4x1xf32> to vector<4x128xf32>
    %12 = arith.mulf %9, %11 : vector<4x128xf32>
    %c0_9 = arith.constant 0 : index
    %c0_10 = arith.constant 0 : index
    %13 = vector.load %arg7[%c0_9, %c0_10] : memref<4x1xf32, #tpu.memory_space<vmem>>, vector<4x1xf32>
    %14 = vector.broadcast %13 : vector<4x1xf32> to vector<4x128xf32>
    %15 = arith.addf %12, %14 : vector<4x128xf32>
    %c0_11 = arith.constant 0 : index
    %c0_12 = arith.constant 0 : index
    %16 = vector.load %arg4[%c0_11, %c0_12] : memref<8x72xbf16, #tpu.memory_space<vmem>>, vector<8x72xbf16>
    %17 = arith.truncf %8 : vector<72x128xf32> to vector<72x128xbf16>
    %cst_13 = arith.constant dense<0.000000e+00> : vector<8x128xf32>
    %18 = tpu.matmul %16, %17, %cst_13 {dimension_numbers = #tpu.dot_dimension_numbers<[1], [0], [0], [1], [0, 0, 1, 1], [], []>} : vector<8x72xbf16>, vector<72x128xbf16>, vector<8x128xf32> -> vector<8x128xf32>
    %c0_14 = arith.constant 0 : index
    %c0_15 = arith.constant 0 : index
    %19 = vector.load %arg8[%c0_14, %c0_15] : memref<8x4xbf16, #tpu.memory_space<vmem>>, vector<8x4xbf16>
    %20 = arith.truncf %15 : vector<4x128xf32> to vector<4x128xbf16>
    %cst_16 = arith.constant dense<0.000000e+00> : vector<8x128xf32>
    %21 = tpu.matmul %19, %20, %cst_16 {dimension_numbers = #tpu.dot_dimension_numbers<[1], [0], [0], [1], [0, 0, 1, 1], [], []>} : vector<8x4xbf16>, vector<4x128xbf16>, vector<8x128xf32> -> vector<8x128xf32>
    %22 = arith.addf %18, %21 : vector<8x128xf32>
    %c0_17 = arith.constant 0 : index
    %c0_18 = arith.constant 0 : index
    %23 = vector.load %arg9[%c0_17, %c0_18] : memref<8x1xf32, #tpu.memory_space<vmem>>, vector<8x1xf32>
    %24 = vector.broadcast %23 : vector<8x1xf32> to vector<8x128xf32>
    %25 = arith.addf %22, %24 : vector<8x128xf32>
    %c0_19 = arith.constant 0 : index
    %c0_20 = arith.constant 0 : index
    %26 = vector.load %arg10[%c0_19, %c0_20] : memref<8x128xf32, #tpu.memory_space<vmem>>, vector<8x128xf32>
    tpu.vector_store %arg10[%c0_19, %c0_20], %25 {strides = array<i32>} : memref<8x128xf32, #tpu.memory_space<vmem>>, vector<8x128xf32>,
    return
  }
  func.func @transform_0(%arg0: i32) -> (i32, i32) {
    %c0_i32 = arith.constant 0 : i32
    %c0_i32_0 = arith.constant 0 : i32
    return %c0_i32, %arg0 : i32, i32
  }
  func.func @transform_1(%arg0: i32) -> (i32, i32) {
    %c0_i32 = arith.constant 0 : i32
    %c0_i32_0 = arith.constant 0 : i32
    %c0_i32_1 = arith.constant 0 : i32
    return %c0_i32, %c0_i32_0 : i32, i32
  }
  func.func @transform_2(%arg0: i32) -> (i32, i32) {
    %c0_i32 = arith.constant 0 : i32
    %c0_i32_0 = arith.constant 0 : i32
    %c0_i32_1 = arith.constant 0 : i32
    return %c0_i32, %c0_i32_0 : i32, i32
  }
  func.func @transform_3(%arg0: i32) -> (i32, i32) {
    %c0_i32 = arith.constant 0 : i32
    %c0_i32_0 = arith.constant 0 : i32
    %c0_i32_1 = arith.constant 0 : i32
    return %c0_i32, %c0_i32_0 : i32, i32
  }
  func.func @transform_4(%arg0: i32) -> (i32, i32) {
    %c0_i32 = arith.constant 0 : i32
    %c0_i32_0 = arith.constant 0 : i32
    return %c0_i32, %arg0 : i32, i32
  }
  func.func @transform_5(%arg0: i32) -> (i32, i32) {
    %c0_i32 = arith.constant 0 : i32
    %c0_i32_0 = arith.constant 0 : i32
    %c0_i32_1 = arith.constant 0 : i32
    return %c0_i32, %c0_i32_0 : i32, i32
  }
  func.func @transform_6(%arg0: i32) -> (i32, i32) {
    %c0_i32 = arith.constant 0 : i32
    %c0_i32_0 = arith.constant 0 : i32
    %c0_i32_1 = arith.constant 0 : i32
    return %c0_i32, %c0_i32_0 : i32, i32
  }
  func.func @transform_7(%arg0: i32) -> (i32, i32) {
    %c0_i32 = arith.constant 0 : i32
    %c0_i32_0 = arith.constant 0 : i32
    %c0_i32_1 = arith.constant 0 : i32
    return %c0_i32, %c0_i32_0 : i32, i32
  }
  func.func @transform_8(%arg0: i32) -> (i32, i32) {
    %c0_i32 = arith.constant 0 : i32
    %c0_i32_0 = arith.constant 0 : i32
    %c0_i32_1 = arith.constant 0 : i32
    return %c0_i32, %c0_i32_0 : i32, i32
  }
  func.func @transform_9(%arg0: i32) -> (i32, i32) {
    %c0_i32 = arith.constant 0 : i32
    %c0_i32_0 = arith.constant 0 : i32
    return %c0_i32, %arg0 : i32, i32
  }
}

</mosaic_0001>

<llo_original>
// kernel: resblock_down.2
$region0: #{resblock_down.2}
  #allocation0 [shape = 'u32[]', space=smem, size = 0x4, offset = 0x4, fixed_abs, tag = 'smem constant byte address 0x4 - core index']
  #allocation1 [shape = 'u32[144,128]{1,0:T(1,128)}', space=vmem, size = 0x12000, scoped, tag = 'internal scratch']
  %s0 = inlined_call_operand.vmem [shape: f32[36,128], index: 0, kind: input, shape index: {}]
  %s1 = inlined_call_operand.vmem [shape: f32[36,1], index: 1, kind: input, shape index: {}]
  %s2 = inlined_call_operand.vmem [shape: f32[36,1], index: 2, kind: input, shape index: {}]
  %s3 = inlined_call_operand.vmem [shape: bf16[8,36], index: 3, kind: input, shape index: {}]
  %s4 = inlined_call_operand.vmem [shape: f32[8,1], index: 4, kind: input, shape index: {}]
  %s5 = inlined_call_operand.vmem [shape: f32[8,128], index: 5, kind: output, shape index: {}]
  %s6 = sld [smem:[#allocation0]]
  $region30: #{resblock_down.2} parent=0
    _
  %s8 = ssub.s32 1, %s6
  %s9 = scalar_select 0, %s8, %s6
  // Predicated region
  $region2: #{resblock_down.2} parent=0 // pred_check
    _
  $region3: #{resblock_down.2} parent=0 // pred_check_branch
    %11 = sbr.rel (0) target = $region5
  $region4: #{resblock_down.2} parent=0 // pred_region
    _
  $region5: #{resblock_down.2} parent=0 // pred_fallthru
    _
  // Predicated region
  $region6: #{resblock_down.2} parent=0 // pred_check
    _
  $region7: #{resblock_down.2} parent=0 // pred_check_branch
    %13 = sbr.rel (0) target = $region9
  $region8: #{resblock_down.2} parent=0 // pred_region
    _
  $region9: #{resblock_down.2} parent=0 // pred_fallthru
    _
  // Predicated region
  $region10: #{resblock_down.2} parent=0 // pred_check
    _
  $region11: #{resblock_down.2} parent=0 // pred_check_branch
    %15 = sbr.rel (0) target = $region13
  $region12: #{resblock_down.2} parent=0 // pred_region
    _
  $region13: #{resblock_down.2} parent=0 // pred_fallthru
    _
  // Predicated region
  $region14: #{resblock_down.2} parent=0 // pred_check
    _
  $region15: #{resblock_down.2} parent=0 // pred_check_branch
    %17 = sbr.rel (0) target = $region17
  $region16: #{resblock_down.2} parent=0 // pred_region
    _
  $region17: #{resblock_down.2} parent=0 // pred_fallthru
    _
  // Predicated region
  $region18: #{resblock_down.2} parent=0 // pred_check
    _
  $region19: #{resblock_down.2} parent=0 // pred_check_branch
    %19 = sbr.rel (0) target = $region21
  $region20: #{resblock_down.2} parent=0 // pred_region
    _
  $region21: #{resblock_down.2} parent=0 // pred_fallthru
    _
  %v21 = vld [vmem:[%s0] sm:$0xff]
  %v22 = vld [vmem:[%s0 + $0x8] sm:$0xff]
  %v23 = vld [vmem:[%s0 + $0x10] sm:$0xff]
  %v24 = vld [vmem:[%s0 + $0x18] sm:$0xff]
  %v25 = vld [vmem:[%s0 + $0x20] sm:$0xf]
  %v26 = vld [vmem:[%s1] sm:$0xff]
  %v27 = vld [vmem:[%s1 + $0x8] sm:$0xff]
  %v28 = vld [vmem:[%s1 + $0x10] sm:$0xff]
  %v29 = vld [vmem:[%s1 + $0x18] sm:$0xff]
  %v30 = vld [vmem:[%s1 + $0x20] sm:$0xf]
  %32 = vset.pattern.permute.xlu0 0
  %33 = vperm.xlu0 %32, %v26
  %v34 = vpop.permute.xlu0 %33
  %37 = vset.pattern.permute.xlu0 0
  %38 = vperm.xlu0 %37, %v27
  %v39 = vpop.permute.xlu0 %38
  %42 = vset.pattern.permute.xlu0 0
  %43 = vperm.xlu0 %42, %v28
  %v44 = vpop.permute.xlu0 %43
  %47 = vset.pattern.permute.xlu0 0
  %48 = vperm.xlu0 %47, %v29
  %v49 = vpop.permute.xlu0 %48
  %52 = vset.pattern.permute.xlu0 0
  %53 = vperm.xlu0 %52, %v30
  %v54 = vpop.permute.xlu0 %53
  %v56 = vmul.f32 %v21, %v34
  %v57 = vmul.f32 %v22, %v39
  %v58 = vmul.f32 %v23, %v44
  %v59 = vmul.f32 %v24, %v49
  %v60 = vmul.f32 %v25, %v54
  %v61 = vld [vmem:[%s2] sm:$0xff]
  %v62 = vld [vmem:[%s2 + $0x8] sm:$0xff]
  %v63 = vld [vmem:[%s2 + $0x10] sm:$0xff]
  %v64 = vld [vmem:[%s2 + $0x18] sm:$0xff]
  %v65 = vld [vmem:[%s2 + $0x20] sm:$0xf]
  %67 = vset.pattern.permute.xlu0 0
  %68 = vperm.xlu0 %67, %v61
  %v69 = vpop.permute.xlu0 %68
  %72 = vset.pattern.permute.xlu0 0
  %73 = vperm.xlu0 %72, %v62
  %v74 = vpop.permute.xlu0 %73
  %77 = vset.pattern.permute.xlu0 0
  %78 = vperm.xlu0 %77, %v63
  %v79 = vpop.permute.xlu0 %78
  %82 = vset.pattern.permute.xlu0 0
  %83 = vperm.xlu0 %82, %v64
  %v84 = vpop.permute.xlu0 %83
  %87 = vset.pattern.permute.xlu0 0
  %88 = vperm.xlu0 %87, %v65
  %v89 = vpop.permute.xlu0 %88
  %v91 = vadd.f32 %v56, %v69
  %v92 = vadd.f32 %v57, %v74
  %v93 = vadd.f32 %v58, %v79
  %v94 = vadd.f32 %v59, %v84
  %v95 = vadd.f32 %v60, %v89
  %v96 = vmax.f32 %v91, 0.0
  %v97 = vmax.f32 %v92, 0.0
  %v98 = vmax.f32 %v93, 0.0
  %v99 = vmax.f32 %v94, 0.0
  %v100 = vmax.f32 %v95, 0.0
  %v101 = vld [vmem:[%s3] sm:$0xf]
  %v102 = vpack.c.bf16 %v97, %v96
  %v103 = vpack.c.bf16 %v99, %v98
  %v104 = vpack.c.bf16 %v100, %v100
  %v105 = vld [vmem:[%s4] sm:$0xff]
  %107 = vset.pattern.permute.xlu0 0
  %108 = vperm.xlu0 %107, %v105
  %v109 = vpop.permute.xlu0 %108
  %vm111 = vcmask 293888
  %v113 = vsel %vm111, %v101, 0
  %vm115 = vcmask 1041408
  %v117 = vsel %vm115, %v104, 0
  %119 = vmatprep.subr.bf16.mxu0 0
  %120 = vmatpush1.bf16.msra.mxu0 %v102
  %121 = vmatprep.subr.bf16.mxu0 0
  %122 = vmatpush1.bf16.msra.mxu0 %v103
  %123 = vmatprep.subr.bf16.mxu0 0
  %124 = vmatpush1.bf16.msra.mxu0 %v117
  %125 = vmatprep.subr.bf16.mxu0 0
  %126 = vmatpush1.bf16.msra.mxu0 0
  %127 = vmatprep.subr.bf16.mxu0 0
  %128 = vmatpush1.bf16.msra.mxu0 0
  %129 = vmatprep.subr.bf16.mxu0 0
  %130 = vmatpush1.bf16.msra.mxu0 0
  %131 = vmatprep.subr.bf16.mxu0 0
  %132 = vmatpush1.bf16.msra.mxu0 0
  %133 = vmatprep.subr.bf16.mxu0 0
  %134 = vmatpush1.bf16.msra.mxu0 0
  %135 = vmatprep.subr.bf16.mxu0 0
  %136 = vmatpush1.bf16.msra.mxu0 0
  %137 = vmatprep.subr.bf16.mxu0 0
  %138 = vmatpush1.bf16.msra.mxu0 0
  %139 = vmatprep.subr.bf16.mxu0 0
  %140 = vmatpush1.bf16.msra.mxu0 0
  %141 = vmatprep.subr.bf16.mxu0 0
  %142 = vmatpush1.bf16.msra.mxu0 0
  %143 = vmatprep.subr.bf16.mxu0 0
  %144 = vmatpush1.bf16.msra.mxu0 0
  %145 = vmatprep.subr.bf16.mxu0 0
  %146 = vmatpush1.bf16.msra.mxu0 0
  %147 = vmatprep.subr.bf16.mxu0 0
  %148 = vmatpush1.bf16.msra.mxu0 0
  %149 = vmatprep.subr.bf16.mxu0 0
  %150 = vmatpush1.bf16.msra.mxu0 0
  %151 = vmatprep.mubr.bf16.mxu0 0
  %152 = vmatmul.mubr.bf16.gmra.mrb[0].mxu0 %v113
  %v153 = vpop.f32.mrb[0].mxu0
  %v154 = vadd.f32 %v109, %v153
  %v155 = vpop.f32.mrb[0].mxu0
  %v156 = vpop.f32.mrb[0].mxu0
  %v157 = vpop.f32.mrb[0].mxu0
  %158 = vdwg.mxu0
  %159 = vst [vmem:[%s5] sm:$0xff] %v154
  // Predicated region
  $region22: #{resblock_down.2} parent=0 // pred_check
    _
  $region23: #{resblock_down.2} parent=0 // pred_check_branch
    %161 = sbr.rel (0) target = $region25
  $region24: #{resblock_down.2} parent=0 // pred_region
    _
  $region25: #{resblock_down.2} parent=0 // pred_fallthru
    _
  // Predicated region
  $region26: #{resblock_down.2} parent=0 // pred_check
    _
  $region27: #{resblock_down.2} parent=0 // pred_check_branch
    %163 = sbr.rel (0) target = $region29
  $region28: #{resblock_down.2} parent=0 // pred_region
    _
  $region29: #{resblock_down.2} parent=0 // pred_fallthru
    _

// kernel: resblock_down.3
$region0: #{resblock_down.3}
  #allocation0 [shape = 'u32[]', space=smem, size = 0x4, offset = 0x4, fixed_abs, tag = 'smem constant byte address 0x4 - core index']
  #allocation1 [shape = 'u32[144,128]{1,0:T(1,128)}', space=vmem, size = 0x12000, scoped, tag = 'internal scratch']
  %s0 = inlined_call_operand.vmem [shape: f32[72,128], index: 0, kind: input, shape index: {}]
  %s1 = inlined_call_operand.vmem [shape: f32[72,1], index: 1, kind: input, shape index: {}]
  %s2 = inlined_call_operand.vmem [shape: f32[72,1], index: 2, kind: input, shape index: {}]
  %s3 = inlined_call_operand.vmem [shape: bf16[8,72], index: 3, kind: input, shape index: {}]
  %s4 = inlined_call_operand.vmem [shape: f32[4,128], index: 4, kind: input, shape index: {}]
  %s5 = inlined_call_operand.vmem [shape: f32[4,1], index: 5, kind: input, shape index: {}]
  %s6 = inlined_call_operand.vmem [shape: f32[4,1], index: 6, kind: input, shape index: {}]
  %s7 = inlined_call_operand.vmem [shape: bf16[8,4], index: 7, kind: input, shape index: {}]
  %s8 = inlined_call_operand.vmem [shape: f32[8,1], index: 8, kind: input, shape index: {}]
  %s9 = inlined_call_operand.vmem [shape: f32[8,128], index: 9, kind: output, shape index: {}]
  %s10 = sld [smem:[#allocation0]]
  $region46: #{resblock_down.3} parent=0
    _
  %s12 = ssub.s32 1, %s10
  %s13 = scalar_select 0, %s12, %s10
  // Predicated region
  $region2: #{resblock_down.3} parent=0 // pred_check
    _
  $region3: #{resblock_down.3} parent=0 // pred_check_branch
    %15 = sbr.rel (0) target = $region5
  $region4: #{resblock_down.3} parent=0 // pred_region
    _
  $region5: #{resblock_down.3} parent=0 // pred_fallthru
    _
  // Predicated region
  $region6: #{resblock_down.3} parent=0 // pred_check
    _
  $region7: #{resblock_down.3} parent=0 // pred_check_branch
    %17 = sbr.rel (0) target = $region9
  $region8: #{resblock_down.3} parent=0 // pred_region
    _
  $region9: #{resblock_down.3} parent=0 // pred_fallthru
    _
  // Predicated region
  $region10: #{resblock_down.3} parent=0 // pred_check
    _
  $region11: #{resblock_down.3} parent=0 // pred_check_branch
    %19 = sbr.rel (0) target = $region13
  $region12: #{resblock_down.3} parent=0 // pred_region
    _
  $region13: #{resblock_down.3} parent=0 // pred_fallthru
    _
  // Predicated region
  $region14: #{resblock_down.3} parent=0 // pred_check
    _
  $region15: #{resblock_down.3} parent=0 // pred_check_branch
    %21 = sbr.rel (0) target = $region17
  $region16: #{resblock_down.3} parent=0 // pred_region
    _
  $region17: #{resblock_down.3} parent=0 // pred_fallthru
    _
  // Predicated region
  $region18: #{resblock_down.3} parent=0 // pred_check
    _
  $region19: #{resblock_down.3} parent=0 // pred_check_branch
    %23 = sbr.rel (0) target = $region21
  $region20: #{resblock_down.3} parent=0 // pred_region
    _
  $region21: #{resblock_down.3} parent=0 // pred_fallthru
    _
  // Predicated region
  $region22: #{resblock_down.3} parent=0 // pred_check
    _
  $region23: #{resblock_down.3} parent=0 // pred_check_branch
    %25 = sbr.rel (0) target = $region25
  $region24: #{resblock_down.3} parent=0 // pred_region
    _
  $region25: #{resblock_down.3} parent=0 // pred_fallthru
    _
  // Predicated region
  $region26: #{resblock_down.3} parent=0 // pred_check
    _
  $region27: #{resblock_down.3} parent=0 // pred_check_branch
    %27 = sbr.rel (0) target = $region29
  $region28: #{resblock_down.3} parent=0 // pred_region
    _
  $region29: #{resblock_down.3} parent=0 // pred_fallthru
    _
  // Predicated region
  $region30: #{resblock_down.3} parent=0 // pred_check
    _
  $region31: #{resblock_down.3} parent=0 // pred_check_branch
    %29 = sbr.rel (0) target = $region33
  $region32: #{resblock_down.3} parent=0 // pred_region
    _
  $region33: #{resblock_down.3} parent=0 // pred_fallthru
    _
  // Predicated region
  $region34: #{resblock_down.3} parent=0 // pred_check
    _
  $region35: #{resblock_down.3} parent=0 // pred_check_branch
    %31 = sbr.rel (0) target = $region37
  $region36: #{resblock_down.3} parent=0 // pred_region
    _
  $region37: #{resblock_down.3} parent=0 // pred_fallthru
    _
  %v33 = vld [vmem:[%s0] sm:$0xff]
  %v34 = vld [vmem:[%s0 + $0x8] sm:$0xff]
  %v35 = vld [vmem:[%s0 + $0x10] sm:$0xff]
  %v36 = vld [vmem:[%s0 + $0x18] sm:$0xff]
  %v37 = vld [vmem:[%s0 + $0x20] sm:$0xff]
  %v38 = vld [vmem:[%s0 + $0x28] sm:$0xff]
  %v39 = vld [vmem:[%s0 + $0x30] sm:$0xff]
  %v40 = vld [vmem:[%s0 + $0x38] sm:$0xff]
  %v41 = vld [vmem:[%s0 + $0x40] sm:$0xff]
  %v42 = vld [vmem:[%s1] sm:$0xff]
  %v43 = vld [vmem:[%s1 + $0x8] sm:$0xff]
  %v44 = vld [vmem:[%s1 + $0x10] sm:$0xff]
  %v45 = vld [vmem:[%s1 + $0x18] sm:$0xff]
  %v46 = vld [vmem:[%s1 + $0x20] sm:$0xff]
  %v47 = vld [vmem:[%s1 + $0x28] sm:$0xff]
  %v48 = vld [vmem:[%s1 + $0x30] sm:$0xff]
  %v49 = vld [vmem:[%s1 + $0x38] sm:$0xff]
  %v50 = vld [vmem:[%s1 + $0x40] sm:$0xff]
  %52 = vset.pattern.permute.xlu0 0
  %53 = vperm.xlu0 %52, %v42
  %v54 = vpop.permute.xlu0 %53
  %57 = vset.pattern.permute.xlu0 0
  %58 = vperm.xlu0 %57, %v43
  %v59 = vpop.permute.xlu0 %58
  %62 = vset.pattern.permute.xlu0 0
  %63 = vperm.xlu0 %62, %v44
  %v64 = vpop.permute.xlu0 %63
  %67 = vset.pattern.permute.xlu0 0
  %68 = vperm.xlu0 %67, %v45
  %v69 = vpop.permute.xlu0 %68
  %72 = vset.pattern.permute.xlu0 0
  %73 = vperm.xlu0 %72, %v46
  %v74 = vpop.permute.xlu0 %73
  %77 = vset.pattern.permute.xlu0 0
  %78 = vperm.xlu0 %77, %v47
  %v79 = vpop.permute.xlu0 %78
  %82 = vset.pattern.permute.xlu0 0
  %83 = vperm.xlu0 %82, %v48
  %v84 = vpop.permute.xlu0 %83
  %87 = vset.pattern.permute.xlu0 0
  %88 = vperm.xlu0 %87, %v49
  %v89 = vpop.permute.xlu0 %88
  %92 = vset.pattern.permute.xlu0 0
  %93 = vperm.xlu0 %92, %v50
  %v94 = vpop.permute.xlu0 %93
  %v96 = vmul.f32 %v33, %v54
  %v97 = vmul.f32 %v34, %v59
  %v98 = vmul.f32 %v35, %v64
  %v99 = vmul.f32 %v36, %v69
  %v100 = vmul.f32 %v37, %v74
  %v101 = vmul.f32 %v38, %v79
  %v102 = vmul.f32 %v39, %v84
  %v103 = vmul.f32 %v40, %v89
  %v104 = vmul.f32 %v41, %v94
  %v105 = vld [vmem:[%s2] sm:$0xff]
  %v106 = vld [vmem:[%s2 + $0x8] sm:$0xff]
  %v107 = vld [vmem:[%s2 + $0x10] sm:$0xff]
  %v108 = vld [vmem:[%s2 + $0x18] sm:$0xff]
  %v109 = vld [vmem:[%s2 + $0x20] sm:$0xff]
  %v110 = vld [vmem:[%s2 + $0x28] sm:$0xff]
  %v111 = vld [vmem:[%s2 + $0x30] sm:$0xff]
  %v112 = vld [vmem:[%s2 + $0x38] sm:$0xff]
  %v113 = vld [vmem:[%s2 + $0x40] sm:$0xff]
  %115 = vset.pattern.permute.xlu0 0
  %116 = vperm.xlu0 %115, %v105
  %v117 = vpop.permute.xlu0 %116
  %120 = vset.pattern.permute.xlu0 0
  %121 = vperm.xlu0 %120, %v106
  %v122 = vpop.permute.xlu0 %121
  %125 = vset.pattern.permute.xlu0 0
  %126 = vperm.xlu0 %125, %v107
  %v127 = vpop.permute.xlu0 %126
  %130 = vset.pattern.permute.xlu0 0
  %131 = vperm.xlu0 %130, %v108
  %v132 = vpop.permute.xlu0 %131
  %135 = vset.pattern.permute.xlu0 0
  %136 = vperm.xlu0 %135, %v109
  %v137 = vpop.permute.xlu0 %136
  %140 = vset.pattern.permute.xlu0 0
  %141 = vperm.xlu0 %140, %v110
  %v142 = vpop.permute.xlu0 %141
  %145 = vset.pattern.permute.xlu0 0
  %146 = vperm.xlu0 %145, %v111
  %v147 = vpop.permute.xlu0 %146
  %150 = vset.pattern.permute.xlu0 0
  %151 = vperm.xlu0 %150, %v112
  %v152 = vpop.permute.xlu0 %151
  %155 = vset.pattern.permute.xlu0 0
  %156 = vperm.xlu0 %155, %v113
  %v157 = vpop.permute.xlu0 %156
  %v159 = vadd.f32 %v96, %v117
  %v160 = vadd.f32 %v97, %v122
  %v161 = vadd.f32 %v98, %v127
  %v162 = vadd.f32 %v99, %v132
  %v163 = vadd.f32 %v100, %v137
  %v164 = vadd.f32 %v101, %v142
  %v165 = vadd.f32 %v102, %v147
  %v166 = vadd.f32 %v103, %v152
  %v167 = vadd.f32 %v104, %v157
  %v168 = vmax.f32 %v159, 0.0
  %v169 = vmax.f32 %v160, 0.0
  %v170 = vmax.f32 %v161, 0.0
  %v171 = vmax.f32 %v162, 0.0
  %v172 = vmax.f32 %v163, 0.0
  %v173 = vmax.f32 %v164, 0.0
  %v174 = vmax.f32 %v165, 0.0
  %v175 = vmax.f32 %v166, 0.0
  %v176 = vmax.f32 %v167, 0.0
  %v177 = vld [vmem:[%s4] sm:$0xf]
  %v178 = vld [vmem:[%s5] sm:$0xf]
  %180 = vset.pattern.permute.xlu0 0
  %181 = vperm.xlu0 %180, %v178
  %v182 = vpop.permute.xlu0 %181
  %v184 = vmul.f32 %v177, %v182
  %v185 = vld [vmem:[%s6] sm:$0xf]
  %187 = vset.pattern.permute.xlu0 0
  %188 = vperm.xlu0 %187, %v185
  %v189 = vpop.permute.xlu0 %188
  %v191 = vadd.f32 %v184, %v189
  %v192 = vld [vmem:[%s3] sm:$0xf]
  %v193 = vpack.c.bf16 %v169, %v168
  %v194 = vpack.c.bf16 %v171, %v170
  %v195 = vpack.c.bf16 %v173, %v172
  %v196 = vpack.c.bf16 %v175, %v174
  %v197 = vpack.c.bf16 %v176, %v176
  %v198 = vld [vmem:[%s7] sm:$0xf]
  %v199 = vpack.c.bf16 %v191, %v191
  %vm200 = vcmask 31744
  %v202 = vsel %vm200, %v198, 0
  %vm204 = vcmask 1041408
  %v206 = vsel %vm204, %v199, 0
  %208 = vmatprep.subr.bf16.mxu0 0
  %209 = vmatpush1.bf16.msra.mxu0 %v206
  %210 = vmatprep.subr.bf16.mxu0 0
  %211 = vmatpush1.bf16.msra.mxu0 0
  %212 = vmatprep.subr.bf16.mxu0 0
  %213 = vmatpush1.bf16.msra.mxu0 0
  %214 = vmatprep.subr.bf16.mxu0 0
  %215 = vmatpush1.bf16.msra.mxu0 0
  %216 = vmatprep.subr.bf16.mxu0 0
  %217 = vmatpush1.bf16.msra.mxu0 0
  %218 = vmatprep.subr.bf16.mxu0 0
  %219 = vmatpush1.bf16.msra.mxu0 0
  %220 = vmatprep.subr.bf16.mxu0 0
  %221 = vmatpush1.bf16.msra.mxu0 0
  %222 = vmatprep.subr.bf16.mxu0 0
  %223 = vmatpush1.bf16.msra.mxu0 0
  %224 = vmatprep.subr.bf16.mxu0 0
  %225 = vmatpush1.bf16.msra.mxu0 0
  %226 = vmatprep.subr.bf16.mxu0 0
  %227 = vmatpush1.bf16.msra.mxu0 0
  %228 = vmatprep.subr.bf16.mxu0 0
  %229 = vmatpush1.bf16.msra.mxu0 0
  %230 = vmatprep.subr.bf16.mxu0 0
  %231 = vmatpush1.bf16.msra.mxu0 0
  %232 = vmatprep.subr.bf16.mxu0 0
  %233 = vmatpush1.bf16.msra.mxu0 0
  %234 = vmatprep.subr.bf16.mxu0 0
  %235 = vmatpush1.bf16.msra.mxu0 0
  %236 = vmatprep.subr.bf16.mxu0 0
  %237 = vmatpush1.bf16.msra.mxu0 0
  %238 = vmatprep.subr.bf16.mxu0 0
  %239 = vmatpush1.bf16.msra.mxu0 0
  %240 = vmatprep.mubr.bf16.mxu0 0
  %241 = vmatmul.mubr.bf16.gmra.mrb[0].mxu0 %v202
  %v242 = vpop.f32.mrb[0].mxu0
  %v243 = vadd.f32 0.0, %v242
  %v244 = vpop.f32.mrb[0].mxu0
  %v245 = vpop.f32.mrb[0].mxu0
  %v246 = vpop.f32.mrb[0].mxu0
  %247 = vdwg.mxu0
  %vm248 = vcmask 588800
  %v250 = vsel %vm248, %v192, 0
  %vm252 = vcmask 1043456
  %v254 = vsel %vm252, %v197, 0
  %256 = vmatprep.subr.bf16.mxu0 0
  %257 = vmatpush1.bf16.msra.mxu0 %v193
  %258 = vmatprep.subr.bf16.mxu0 0
  %259 = vmatpush1.bf16.msra.mxu0 %v194
  %260 = vmatprep.subr.bf16.mxu0 0
  %261 = vmatpush1.bf16.msra.mxu0 %v195
  %262 = vmatprep.subr.bf16.mxu0 0
  %263 = vmatpush1.bf16.msra.mxu0 %v196
  %264 = vmatprep.subr.bf16.mxu0 0
  %265 = vmatpush1.bf16.msra.mxu0 %v254
  %266 = vmatprep.subr.bf16.mxu0 0
  %267 = vmatpush1.bf16.msra.mxu0 0
  %268 = vmatprep.subr.bf16.mxu0 0
  %269 = vmatpush1.bf16.msra.mxu0 0
  %270 = vmatprep.subr.bf16.mxu0 0
  %271 = vmatpush1.bf16.msra.mxu0 0
  %272 = vmatprep.subr.bf16.mxu0 0
  %273 = vmatpush1.bf16.msra.mxu0 0
  %274 = vmatprep.subr.bf16.mxu0 0
  %275 = vmatpush1.bf16.msra.mxu0 0
  %276 = vmatprep.subr.bf16.mxu0 0
  %277 = vmatpush1.bf16.msra.mxu0 0
  %278 = vmatprep.subr.bf16.mxu0 0
  %279 = vmatpush1.bf16.msra.mxu0 0
  %280 = vmatprep.subr.bf16.mxu0 0
  %281 = vmatpush1.bf16.msra.mxu0 0
  %282 = vmatprep.subr.bf16.mxu0 0
  %283 = vmatpush1.bf16.msra.mxu0 0
  %284 = vmatprep.subr.bf16.mxu0 0
  %285 = vmatpush1.bf16.msra.mxu0 0
  %286 = vmatprep.subr.bf16.mxu0 0
  %287 = vmatpush1.bf16.msra.mxu0 0
  %288 = vmatprep.mubr.bf16.mxu0 0
  %289 = vmatmul.mubr.bf16.gmra.mrb[0].mxu0 %v250
  %v290 = vpop.f32.mrb[0].mxu0
  %v291 = vadd.f32 %v243, %v290
  %v292 = vpop.f32.mrb[0].mxu0
  %v293 = vpop.f32.mrb[0].mxu0
  %v294 = vpop.f32.mrb[0].mxu0
  %295 = vdwg.mxu0
  %v296 = vld [vmem:[%s8] sm:$0xff]
  %298 = vset.pattern.permute.xlu0 0
  %299 = vperm.xlu0 %298, %v296
  %v300 = vpop.permute.xlu0 %299
  %v302 = vadd.f32 %v291, %v300
  %303 = vst [vmem:[%s9] sm:$0xff] %v302
  // Predicated region
  $region38: #{resblock_down.3} parent=0 // pred_check
    _
  $region39: #{resblock_down.3} parent=0 // pred_check_branch
    %305 = sbr.rel (0) target = $region41
  $region40: #{resblock_down.3} parent=0 // pred_region
    _
  $region41: #{resblock_down.3} parent=0 // pred_fallthru
    _
  // Predicated region
  $region42: #{resblock_down.3} parent=0 // pred_check
    _
  $region43: #{resblock_down.3} parent=0 // pred_check_branch
    %307 = sbr.rel (0) target = $region45
  $region44: #{resblock_down.3} parent=0 // pred_region
    _
  $region45: #{resblock_down.3} parent=0 // pred_fallthru
    _

</llo_original>
